<compile_context>
chip_gen: v6e
topology: v6e:2x2x1
jax: 0.10.0
libtpu: 0.0.40
codegen_flags: <defaults>
</compile_context>

<pallas_src>
import functools

import jax
import jax.numpy as jnp
from jax.experimental import pallas as pl
from jax.experimental.pallas import tpu as pltpu


def _decoder_kernel(x_ref, w_ref, b_ref, o_ref, acc_ref, *,
                    true_t, tt, mask_time, pooling, apply_softmax):
    # x_ref: (tb, F, tt) native dtype     w_ref: (F, C) native dtype
    # b_ref: (1, C) f32                   o_ref: (tb, C) f32
    # acc_ref: (tb, F) f32 scratch (running time reduction)
    t = pl.program_id(1)

    @pl.when(t == 0)
    def _init():
        if pooling == "avg":
            acc_ref[...] = jnp.zeros_like(acc_ref)
        else:  # max
            acc_ref[...] = jnp.full(acc_ref.shape, -jnp.inf, acc_ref.dtype)

    x = x_ref[...]  # (tb, F, tt), native dtype — no whole-block f32 copy
    if mask_time:
        # Zero/neutralize the ragged tail of the last time block: Pallas does
        # not guarantee zero-filled out-of-bounds reads.
        lane = jax.lax.broadcasted_iota(jnp.int32, x.shape, dimension=2)
        valid = true_t - t * tt          # >= tt on all non-final time blocks
        if pooling == "avg":
            x = jnp.where(lane < valid, x, jnp.zeros_like(x))
        else:
            x = jnp.where(lane < valid, x, -jnp.inf)

    if pooling == "avg":
        # f32 accumulation; cast fuses into the lane reduction.
        acc_ref[...] += jnp.sum(x, axis=-1, dtype=jnp.float32)
    else:
        acc_ref[...] = jnp.maximum(acc_ref[...],
                                   jnp.max(x, axis=-1).astype(jnp.float32))

    @pl.when(t == pl.num_programs(1) - 1)
    def _finalize():
        if pooling == "avg":
            pooled = acc_ref[...] * (1.0 / true_t)       # mean over the true T
        else:
            pooled = acc_ref[...]
        logits = jnp.dot(pooled, w_ref[...],
                         preferred_element_type=jnp.float32) + b_ref[...]
        if apply_softmax:
            m = jnp.max(logits, axis=-1, keepdims=True)
            e = jnp.exp(logits - m)
            logits = e / jnp.sum(e, axis=-1, keepdims=True)
        o_ref[...] = logits.astype(o_ref.dtype)


def conv_asr_decoder_classification(x, weight, bias, *, return_logits=True,
                                    pooling_type="avg", batch_block=8,
                                    time_block=None,
                                    target_block_bytes=6 << 20):
    """Forward of ConvASRDecoderClassification.

    x:      (B, feat_in, T)  encoder output, native NCW layout, any float dtype
    weight: (num_classes, feat_in)  — torch.nn.Linear weight layout
    bias:   (num_classes,)
    """
    assert pooling_type in ("avg", "max")
    B, F, T = x.shape
    C, Fw = weight.shape
    assert Fw == F
    itemsize = jnp.dtype(x.dtype).itemsize

    # ---- tile selection ----------------------------------------------------
    # Batch tile: the output block's sublane dim must be a multiple of 8 or the
    # full batch.  Ragged last batch block only pads the (tiny) output.
    if B <= batch_block:
        tb = B
    else:
        tb = max(8, (batch_block // 8) * 8)

    # Time tile: lane dim must be a multiple of 128 or the full T.  Sized so a
    # double-buffered x block (plus the resident weight) stays well inside
    # v7x's 64 MiB VMEM while remaining multi-MiB for HBM streaming on v5e/v6e.
    if time_block is None:
        cap = (target_block_bytes // (tb * F * itemsize)) // 128 * 128
    else:
        cap = (time_block // 128) * 128
    cap = max(128, int(cap))
    tt = T if T <= cap else cap

    nb = pl.cdiv(B, tb)
    nt = pl.cdiv(T, tt)
    b_rows = nb * tb                     # only the output rows are padded
    mask_time = (T % tt) != 0

    w_t = weight.T                       # (F, C), kept in its native dtype
    bias2d = bias.astype(jnp.float32).reshape(1, C)

    # ---- VMEM budget ---------------------------------------------------------
    x_block_bytes = tb * F * tt * itemsize
    w_bytes = F * C * jnp.dtype(weight.dtype).itemsize
    need = (2 * x_block_bytes + 2 * w_bytes + 2 * C * 4
            + 2 * tb * C * 4 + tb * F * 4)
    vmem_limit = int(min(max(need * 3 // 2 + (8 << 20), 32 << 20), 96 << 20))

    cost = pl.CostEstimate(
        flops=B * T * F + 2 * B * F * C,
        transcendentals=0 if return_logits else B * C,
        bytes_accessed=B * F * T * itemsize + w_bytes + C * 4 + B * C * 4,
    )

    kernel = functools.partial(
        _decoder_kernel, true_t=T, tt=tt, mask_time=mask_time,
        pooling=pooling_type, apply_softmax=not return_logits)

    out = pl.pallas_call(
        kernel,
        out_shape=jax.ShapeDtypeStruct((b_rows, C), jnp.float32),
        grid_spec=pltpu.PrefetchScalarGridSpec(
            num_scalar_prefetch=0,
            grid=(nb, nt),                                        # (batch, time)
            in_specs=[
                pl.BlockSpec((tb, F, tt), lambda b, t: (b, 0, t)),  # x (streamed)
                pl.BlockSpec((F, C), lambda b, t: (0, 0)),          # W^T (resident)
                pl.BlockSpec((1, C), lambda b, t: (0, 0)),          # bias
            ],
            out_specs=pl.BlockSpec((tb, C), lambda b, t: (b, 0)),
            scratch_shapes=[pltpu.VMEM((tb, F), jnp.float32)],      # time reduce
        ),
        compiler_params=pltpu.CompilerParams(
            dimension_semantics=("parallel", "arbitrary"),
            vmem_limit_bytes=vmem_limit),
        cost_estimate=cost,
    )(x, w_t, bias2d)

    return out[:B]


def _xavier_uniform(key, shape, dtype=jnp.float32):
    fan_out, fan_in = shape
    limit = (6.0 / (fan_in + fan_out)) ** 0.5
    return jax.random.uniform(key, shape, dtype, minval=-limit, maxval=limit)


if __name__ == "__main__":
    batch, feat_in, timesteps, num_classes = 2, 32, 16, 8

    key = jax.random.PRNGKey(0)
    kx, kw, k2 = jax.random.split(key, 3)

    x = jax.random.normal(kx, (batch, feat_in, timesteps), dtype=jnp.float32)
    weight = _xavier_uniform(kw, (num_classes, feat_in))   # PyTorch Linear layout
    bias = jnp.zeros((num_classes,), dtype=jnp.float32)

    # 1) avg-pool logits (single time block, exact tiles)
    out = jax.block_until_ready(
        conv_asr_decoder_classification(x, weight, bias, return_logits=True))
    ref = jnp.mean(x, axis=-1) @ weight.T + bias
    assert out.shape == (batch, num_classes)
    assert jnp.allclose(out, ref, atol=1e-5, rtol=1e-5)

    # 2) fused in-kernel softmax (return_logits=False)
    probs = jax.block_until_ready(
        conv_asr_decoder_classification(x, weight, bias, return_logits=False))
    assert jnp.allclose(probs, jax.nn.softmax(ref, axis=-1), atol=1e-5, rtol=1e-5)

    # 3) max pooling variant
    out_max = jax.block_until_ready(
        conv_asr_decoder_classification(x, weight, bias, pooling_type="max"))
    ref_max = jnp.max(x, axis=-1) @ weight.T + bias
    assert jnp.allclose(out_max, ref_max, atol=1e-5, rtol=1e-5)

    # 4) ragged time (T=200 with 128-wide time blocks -> in-kernel tail mask)
    #    and ragged batch (B=10 with tb=8 -> padded output rows sliced off).
    x2 = jax.random.normal(k2, (10, feat_in, 200), dtype=jnp.float32)
    out2 = jax.block_until_ready(
        conv_asr_decoder_classification(x2, weight, bias,
                                        time_block=128, batch_block=8))
    ref2 = jnp.mean(x2, axis=-1) @ weight.T + bias
    assert out2.shape == (10, num_classes)
    assert jnp.allclose(out2, ref2, atol=1e-5, rtol=1e-5)

    print("KERNEL_OK")
</pallas_src>

<mosaic_0001>
module attributes {stable_mosaic.version = 11 : i64} {
  func.func @_decoder_kernel(%arg0: i32, %arg1: i32, %arg2: memref<2x32x16xf32, #tpu.memory_space<vmem>>, %arg3: memref<32x8xf32, #tpu.memory_space<vmem>>, %arg4: memref<1x8xf32, #tpu.memory_space<vmem>>, %arg5: memref<2x8xf32, #tpu.memory_space<vmem>>, %arg6: memref<2x32xf32, #tpu.memory_space<vmem>>) attributes {dimension_semantics = [#tpu.dimension_semantics<parallel>, #tpu.dimension_semantics<arbitrary>], iteration_bounds = array<i64: 1, 1>, scalar_prefetch = 0 : i64, scratch_operands = 1 : i64, tpu.core_type = #tpu.core_type<tc>, window_params = [{transform_indices = @transform_0, window_bounds = array<i64: 2, 32, 16>}, {pipeline_mode = #tpu.pipeline_mode<synchronous>, transform_indices = @transform_1, window_bounds = array<i64: 32, 8>}, {pipeline_mode = #tpu.pipeline_mode<synchronous>, transform_indices = @transform_2, window_bounds = array<i64: 1, 8>}, {transform_indices = @transform_3, window_bounds = array<i64: 2, 8>}]} {
    %c0_i32 = arith.constant 0 : i32
    %0 = arith.cmpi eq, %arg1, %c0_i32 : i32
    %1 = arith.extui %0 : i1 to i32
    %c0_i32_0 = arith.constant 0 : i32
    %2 = arith.cmpi ne, %1, %c0_i32_0 : i32
    scf.if %2 {
      %cst_9 = arith.constant 0.000000e+00 : f32
      %11 = vector.broadcast %cst_9 : f32 to vector<2x32xf32>
      %c0_10 = arith.constant 0 : index
      %c0_11 = arith.constant 0 : index
      %12 = vector.load %arg6[%c0_10, %c0_11] : memref<2x32xf32, #tpu.memory_space<vmem>>, vector<2x32xf32>
      tpu.vector_store %arg6[%c0_10, %c0_11], %11 {strides = array<i32>} : memref<2x32xf32, #tpu.memory_space<vmem>>, vector<2x32xf32>,
    } else {
    }
    %c0 = arith.constant 0 : index
    %c0_1 = arith.constant 0 : index
    %c0_2 = arith.constant 0 : index
    %3 = vector.load %arg2[%c0, %c0_1, %c0_2] : memref<2x32x16xf32, #tpu.memory_space<vmem>>, vector<2x32x16xf32>
    %c0_3 = arith.constant 0 : index
    %c0_4 = arith.constant 0 : index
    %4 = vector.load %arg6[%c0_3, %c0_4] : memref<2x32xf32, #tpu.memory_space<vmem>>, vector<2x32xf32>
    %cst = arith.constant dense<0.000000e+00> : vector<2x32xf32>
    %5 = vector.multi_reduction <add>, %3, %cst [2] : vector<2x32x16xf32> to vector<2x32xf32>
    %6 = arith.addf %4, %5 : vector<2x32xf32>
    %c0_5 = arith.constant 0 : index
    %c0_6 = arith.constant 0 : index
    %7 = vector.load %arg6[%c0_5, %c0_6] : memref<2x32xf32, #tpu.memory_space<vmem>>, vector<2x32xf32>
    tpu.vector_store %arg6[%c0_5, %c0_6], %6 {strides = array<i32>} : memref<2x32xf32, #tpu.memory_space<vmem>>, vector<2x32xf32>,
    %c0_i32_7 = arith.constant 0 : i32
    %8 = arith.cmpi eq, %arg1, %c0_i32_7 : i32
    %9 = arith.extui %8 : i1 to i32
    %c0_i32_8 = arith.constant 0 : i32
    %10 = arith.cmpi ne, %9, %c0_i32_8 : i32
    scf.if %10 {
      %c0_9 = arith.constant 0 : index
      %c0_10 = arith.constant 0 : index
      %11 = vector.load %arg6[%c0_9, %c0_10] : memref<2x32xf32, #tpu.memory_space<vmem>>, vector<2x32xf32>
      %cst_11 = arith.constant 6.250000e-02 : f32
      %12 = vector.broadcast %cst_11 : f32 to vector<2x32xf32>
      %13 = arith.mulf %11, %12 : vector<2x32xf32>
      %c0_12 = arith.constant 0 : index
      %c0_13 = arith.constant 0 : index
      %14 = vector.load %arg3[%c0_12, %c0_13] : memref<32x8xf32, #tpu.memory_space<vmem>>, vector<32x8xf32>
      %cst_14 = arith.constant dense<0.000000e+00> : vector<2x8xf32>
      %15 = tpu.matmul %13, %14, %cst_14 {dimension_numbers = #tpu.dot_dimension_numbers<[1], [0], [0], [1], [0, 0, 1, 1], [], []>} : vector<2x32xf32>, vector<32x8xf32>, vector<2x8xf32> -> vector<2x8xf32>
      %c0_15 = arith.constant 0 : index
      %c0_16 = arith.constant 0 : index
      %16 = vector.load %arg4[%c0_15, %c0_16] : memref<1x8xf32, #tpu.memory_space<vmem>>, vector<1x8xf32>
      %17 = vector.broadcast %16 : vector<1x8xf32> to vector<2x8xf32>
      %18 = arith.addf %15, %17 : vector<2x8xf32>
      %c0_17 = arith.constant 0 : index
      %c0_18 = arith.constant 0 : index
      %19 = vector.load %arg5[%c0_17, %c0_18] : memref<2x8xf32, #tpu.memory_space<vmem>>, vector<2x8xf32>
      tpu.vector_store %arg5[%c0_17, %c0_18], %18 {strides = array<i32>} : memref<2x8xf32, #tpu.memory_space<vmem>>, vector<2x8xf32>,
    } else {
    }
    return
  }
  func.func @transform_0(%arg0: i32, %arg1: i32) -> (i32, i32, i32) {
    %c0_i32 = arith.constant 0 : i32
    %c0_i32_0 = arith.constant 0 : i32
    return %arg0, %c0_i32, %arg1 : i32, i32, i32
  }
  func.func @transform_1(%arg0: i32, %arg1: i32) -> (i32, i32) {
    %c0_i32 = arith.constant 0 : i32
    %c0_i32_0 = arith.constant 0 : i32
    %c0_i32_1 = arith.constant 0 : i32
    return %c0_i32, %c0_i32_0 : i32, i32
  }
  func.func @transform_2(%arg0: i32, %arg1: i32) -> (i32, i32) {
    %c0_i32 = arith.constant 0 : i32
    %c0_i32_0 = arith.constant 0 : i32
    %c0_i32_1 = arith.constant 0 : i32
    return %c0_i32, %c0_i32_0 : i32, i32
  }
  func.func @transform_3(%arg0: i32, %arg1: i32) -> (i32, i32) {
    %c0_i32 = arith.constant 0 : i32
    %c0_i32_0 = arith.constant 0 : i32
    return %arg0, %c0_i32 : i32, i32
  }
}

</mosaic_0001>

<llo_original>
// kernel: tpu_custom_call.1
$region0: #{tpu_custom_call.1}
  #allocation0 [shape = 'u32[]', space=smem, size = 0x4, offset = 0x4, fixed_abs, tag = 'smem constant byte address 0x4 - core index']
  #allocation1 [shape = 'u32[144,128]{1,0:T(1,128)}', space=vmem, size = 0x12000, scoped, tag = 'internal scratch']
  #allocation2 [shape = 'f32[2,32]{1,0:T(2,128)}', space=vmem, size = 0x400, scoped, tag = 'scratch operand']
  %s0 = inlined_call_operand.vmem [shape: f32[2,32,16], index: 0, kind: input, shape index: {}]
  %s1 = inlined_call_operand.vmem [shape: f32[32,8], index: 1, kind: input, shape index: {}]
  %s2 = inlined_call_operand.vmem [shape: f32[1,8], index: 2, kind: input, shape index: {}]
  %s3 = inlined_call_operand.hbm [shape: f32[2,8], index: 3, kind: output, shape index: {}]
  %s4 = sld [smem:[#allocation0]]
  $region30: #{tpu_custom_call.1} parent=0
    _
  %s6 = ssub.s32 1, %s4
  %s7 = scalar_select 0, %s6, %s4
  $region1: #{tpu_custom_call.1} parent=0
    #allocation3 [shape = 'u8[1024]{0}', space=vmem, size = 0x400, scoped, tag = 'output window, operand 0, single buffered']
    #allocation4 [shape = 's32[1]{0}', space=sflag, size = 0x4, scoped, tag = 'scoped memory for tpu_custom_call.1']
    %8 = vsyncpa [#allocation4], 0
    // Predicated region
    $region2: #{tpu_custom_call.1} parent=1 // pred_check
      _
    $region3: #{tpu_custom_call.1} parent=1 // pred_check_branch
      %10 = sbr.rel (0) target = $region5
    $region4: #{tpu_custom_call.1} parent=1 // pred_region
      _
    $region5: #{tpu_custom_call.1} parent=1 // pred_fallthru
      _
    // Predicated region
    $region6: #{tpu_custom_call.1} parent=1 // pred_check
      _
    $region7: #{tpu_custom_call.1} parent=1 // pred_check_branch
      %12 = sbr.rel (0) target = $region9
    $region8: #{tpu_custom_call.1} parent=1 // pred_region
      _
    $region9: #{tpu_custom_call.1} parent=1 // pred_fallthru
      _
    // Predicated region
    $region10: #{tpu_custom_call.1} parent=1 // pred_check
      _
    $region11: #{tpu_custom_call.1} parent=1 // pred_check_branch
      %14 = sbr.rel (0) target = $region13
    $region12: #{tpu_custom_call.1} parent=1 // pred_region
      _
    $region13: #{tpu_custom_call.1} parent=1 // pred_fallthru
      _
    %p15 = scmp.eq.s32.totalorder 0, 0
    // Predicated region
    $region14: #{tpu_custom_call.1} parent=1 // pred_check
      %p16 = pneg %p15
    $region15: #{tpu_custom_call.1} parent=1 // pred_check_branch
      %18 = sbr.rel (%p16) target = $region17
    $region16: #{tpu_custom_call.1} parent=1 // pred_region
      %vm19 = vcmask 254976
      %20 = vst.msk [vmem:[#allocation2] sm:$0x3] %vm19, 0.0
    $region17: #{tpu_custom_call.1} parent=1 // pred_fallthru
      _
    %v21 = vld [vmem:[%s0] sm:$0xff]
    %v22 = vld [vmem:[%s0 + $0x8] sm:$0xff]
    %v23 = vld [vmem:[%s0 + $0x10] sm:$0xff]
    %v24 = vld [vmem:[%s0 + $0x18] sm:$0xff]
    %v25 = vld [vmem:[%s0 + $0x20] sm:$0xff]
    %v26 = vld [vmem:[%s0 + $0x28] sm:$0xff]
    %v27 = vld [vmem:[%s0 + $0x30] sm:$0xff]
    %v28 = vld [vmem:[%s0 + $0x38] sm:$0xff]
    %v29 = vld [vmem:[#allocation2] sm:$0x3]
    %vm30 = vcmask 130048
    %v31 = vsel %vm30, %v21, 0.0
    %32 = vadd.xlane.f32.xlu0 %v31
    %v33 = vpop.xlane.xlu0 %32
    %v34 = vsel %vm30, %v22, 0.0
    %35 = vadd.xlane.f32.xlu0 %v34
    %v36 = vpop.xlane.xlu0 %35
    %v37 = vsel %vm30, %v23, 0.0
    %38 = vadd.xlane.f32.xlu0 %v37
    %v39 = vpop.xlane.xlu0 %38
    %v40 = vsel %vm30, %v24, 0.0
    %41 = vadd.xlane.f32.xlu0 %v40
    %v42 = vpop.xlane.xlu0 %41
    %v43 = vsel %vm30, %v25, 0.0
    %44 = vadd.xlane.f32.xlu0 %v43
    %v45 = vpop.xlane.xlu0 %44
    %v46 = vsel %vm30, %v26, 0.0
    %47 = vadd.xlane.f32.xlu0 %v46
    %v48 = vpop.xlane.xlu0 %47
    %v49 = vsel %vm30, %v27, 0.0
    %50 = vadd.xlane.f32.xlu0 %v49
    %v51 = vpop.xlane.xlu0 %50
    %v52 = vsel %vm30, %v28, 0.0
    %53 = vadd.xlane.f32.xlu0 %v52
    %v54 = vpop.xlane.xlu0 %53
    %v63 = vlaneseq
    %v64 = vand.u32 %v63, 127
    %v65 = vlaneseq
    %v66 = vshrl.u32 %v65, 7
    %v67 = vsub.s32 %v64, %v66
    %v68 = vrot.slane %v33, %v67
    %v69 = vadd.s32 %v64, 4294967288
    %v70 = vlaneseq
    %v71 = vshrl.u32 %v70, 7
    %v72 = vsub.s32 %v69, %v71
    %v73 = vrot.slane %v36, %v72
    %vm74 = vcmask 130112
    %v75 = vsel %vm74, %v73, %v68
    %v76 = vadd.s32 %v64, 4294967280
    %v77 = vlaneseq
    %v78 = vshrl.u32 %v77, 7
    %v79 = vsub.s32 %v76, %v78
    %v80 = vrot.slane %v39, %v79
    %vm81 = vcmask 195712
    %v82 = vsel %vm81, %v80, %v75
    %v83 = vadd.s32 %v64, 4294967272
    %v84 = vlaneseq
    %v85 = vshrl.u32 %v84, 7
    %v86 = vsub.s32 %v83, %v85
    %v87 = vrot.slane %v42, %v86
    %vm88 = vcmask 261312
    %v89 = vsel %vm88, %v87, %v82
    %v90 = vlaneseq
    %v91 = vshrl.u32 %v90, 7
    %v92 = vsub.s32 %v64, %v91
    %v93 = vrot.slane %v45, %v92
    %v94 = vlaneseq
    %v95 = vshrl.u32 %v94, 7
    %v96 = vsub.s32 %v69, %v95
    %v97 = vrot.slane %v48, %v96
    %v98 = vsel %vm74, %v97, %v93
    %v99 = vlaneseq
    %v100 = vshrl.u32 %v99, 7
    %v101 = vsub.s32 %v76, %v100
    %v102 = vrot.slane %v51, %v101
    %v103 = vsel %vm81, %v102, %v98
    %v104 = vlaneseq
    %v105 = vshrl.u32 %v104, 7
    %v106 = vsub.s32 %v83, %v105
    %v107 = vrot.slane %v54, %v106
    %v108 = vsel %vm88, %v107, %v103
    %vm109 = vcmask 1041409
    %v110 = vsel %vm109, %v108, %v89
    %v112 = vadd.f32 %v29, %v110
    %vm113 = vcmask 254976
    %114 = vst.msk [vmem:[#allocation2] sm:$0x3] %vm113, %v112
    // Predicated region
    $region18: #{tpu_custom_call.1} parent=1 // pred_check
      %p115 = pneg %p15
    $region19: #{tpu_custom_call.1} parent=1 // pred_check_branch
      %117 = sbr.rel (%p115) target = $region21
    $region20: #{tpu_custom_call.1} parent=1 // pred_region
      %v118 = vld [vmem:[#allocation2] sm:$0x3]
      %v119 = vmul.f32 %v118, 0.0625
      %v120 = vld [vmem:[%s1] sm:$0xff]
      %v121 = vld [vmem:[%s1 + $0x8] sm:$0xff]
      %v122 = vld [vmem:[%s1 + $0x10] sm:$0xff]
      %v123 = vld [vmem:[%s1 + $0x18] sm:$0xff]
      %v124 = vld [vmem:[%s2] sm:$0x1]
      %v126 = vlaneseq
      %v127 = vshrl.u32 %v126, 7
      %v128 = vsub.s32 0, %v127
      %v129 = vrot.slane %v124, %v128
      %vm131 = vcmask 261120
      %v133 = vsel %vm131, %v119, 0
      %135 = vmatprep.subr.mxu0 0.0
      %136 = vmatpush1.msra.mxu0 0.0
      %137 = vmatprep.subr.mxu0 0.0
      %138 = vmatpush1.msra.mxu0 0.0
      %139 = vmatprep.subr.mxu0 0.0
      %140 = vmatpush1.msra.mxu0 0.0
      %141 = vmatprep.subr.mxu0 0.0
      %142 = vmatpush1.msra.mxu0 0.0
      %143 = vmatprep.subr.mxu0 0.0
      %144 = vmatpush1.msra.mxu0 0.0
      %145 = vmatprep.subr.mxu0 0.0
      %146 = vmatpush1.msra.mxu0 0.0
      %147 = vmatprep.subr.mxu0 0.0
      %148 = vmatpush1.msra.mxu0 0.0
      %149 = vmatprep.subr.mxu0 0.0
      %150 = vmatpush1.msra.mxu0 0.0
      %151 = vmatprep.subr.mxu0 0.0
      %152 = vmatpush1.msra.mxu0 0.0
      %153 = vmatprep.subr.mxu0 0.0
      %154 = vmatpush1.msra.mxu0 0.0
      %155 = vmatprep.subr.mxu0 0.0
      %156 = vmatpush1.msra.mxu0 0.0
      %157 = vmatprep.subr.mxu0 0.0
      %158 = vmatpush1.msra.mxu0 0.0
      %159 = vmatprep.subr.mxu0 0.0
      %160 = vmatpush1.msra.mxu0 %v123
      %161 = vmatprep.subr.mxu0 0.0
      %162 = vmatpush1.msra.mxu0 %v122
      %163 = vmatprep.subr.mxu0 0.0
      %164 = vmatpush1.msra.mxu0 %v121
      %165 = vmatprep.subr.mxu0 0.0
      %166 = vmatpush1.msra.mxu0 %v120
      %167 = vmatprep.subr.mxu0 0.0
      %168 = vmatpush2.msra.mxu0 0.0
      %169 = vmatprep.subr.mxu0 0.0
      %170 = vmatpush2.msra.mxu0 0.0
      %171 = vmatprep.subr.mxu0 0.0
      %172 = vmatpush2.msra.mxu0 0.0
      %173 = vmatprep.subr.mxu0 0.0
      %174 = vmatpush2.msra.mxu0 0.0
      %175 = vmatprep.subr.mxu0 0.0
      %176 = vmatpush2.msra.mxu0 0.0
      %177 = vmatprep.subr.mxu0 0.0
      %178 = vmatpush2.msra.mxu0 0.0
      %179 = vmatprep.subr.mxu0 0.0
      %180 = vmatpush2.msra.mxu0 0.0
      %181 = vmatprep.subr.mxu0 0.0
      %182 = vmatpush2.msra.mxu0 0.0
      %183 = vmatprep.subr.mxu0 0.0
      %184 = vmatpush2.msra.mxu0 0.0
      %185 = vmatprep.subr.mxu0 0.0
      %186 = vmatpush2.msra.mxu0 0.0
      %187 = vmatprep.subr.mxu0 0.0
      %188 = vmatpush2.msra.mxu0 0.0
      %189 = vmatprep.subr.mxu0 0.0
      %190 = vmatpush2.msra.mxu0 0.0
      %191 = vmatprep.subr.mxu0 0.0
      %192 = vmatpush2.msra.mxu0 0.0
      %193 = vmatprep.subr.mxu0 0.0
      %194 = vmatpush2.msra.mxu0 0.0
      %195 = vmatprep.subr.mxu0 0.0
      %196 = vmatpush2.msra.mxu0 0.0
      %197 = vmatprep.subr.mxu0 0.0
      %198 = vmatpush2.msra.mxu0 0.0
      %199 = vmatprep.mubr.f32.mxu0 0.0
      %200 = vmatmul.mubr.f32.gmra.mxu0 %v133
      %v201 = vpop.f32.mrf.mxu0
      %v202 = vadd.f32 %v129, %v201
      %v203 = vpop.f32.mrf.mxu0
      %204 = vdwg.mxu0
      %vm205 = vcmask 58368
      %206 = vst.msk [vmem:[#allocation3] sm:$0x3] %vm205, %v202
    $region21: #{tpu_custom_call.1} parent=1 // pred_fallthru
      _
    // Predicated region
    $region22: #{tpu_custom_call.1} parent=1 // pred_check
      _
    $region23: #{tpu_custom_call.1} parent=1 // pred_check_branch
      %208 = sbr.rel (0) target = $region25
    $region24: #{tpu_custom_call.1} parent=1 // pred_region
      %s210 = ssub.s32 32, 32
      %211 = vsyncadd [#allocation4], %s210
      %s213 = sshll.u32 [#allocation3], 4
      %s214 = int_to_ptr.vmem [resolvable:$true] %s213
      %216 = dma.vmem_to_hbm [thread:$0]  %s214, 32, %s3, [#allocation4]
    $region25: #{tpu_custom_call.1} parent=1 // pred_fallthru
      _
    // Predicated region
    $region26: #{tpu_custom_call.1} parent=1 // pred_check
      _
    $region27: #{tpu_custom_call.1} parent=1 // pred_check_branch
      %218 = sbr.rel (0) target = $region29
    $region28: #{tpu_custom_call.1} parent=1 // pred_region
      %219 = dma.done [#allocation4], 32
    $region29: #{tpu_custom_call.1} parent=1 // pred_fallthru
      _
    %220 = vsyncpa [#allocation4], 1

</llo_original>
